<compile_context>
chip_gen: v6e
topology: v6e:2x2x1
jax: 0.10.0
libtpu: 0.0.40
codegen_flags: <defaults>
</compile_context>

<pallas_src>
import jax
import jax.numpy as jnp
from jax.experimental import pallas as pl
from jax.experimental.pallas import tpu as pltpu

_LANE = 128
_MAX_COLS = 8192  # wider lane-dense rows -> fewer DMA descriptors / longer bursts


def identity(x: jax.Array) -> jax.Array:
    """Real forward pass of nn.Identity: a no-op. No kernel, no HBM traffic."""
    return x


def _identity_dma_kernel(x_hbm_ref, o_hbm_ref, sem):
    # Single HBM -> HBM DMA of the whole slab.  The only cost is the
    # unavoidable 2x array size of HBM traffic.
    cp = pltpu.make_async_copy(x_hbm_ref, o_hbm_ref, sem)
    cp.start()
    cp.wait()


def _choose_cols(total: int) -> int:
    """Largest multiple of 128 that divides `total`, capped at _MAX_COLS."""
    c = (min(total, _MAX_COLS) // _LANE) * _LANE
    while c >= _LANE:
        if total % c == 0:
            return c
        c -= _LANE
    return 0


def identity_pallas(x: jax.Array) -> jax.Array:
    """Identity as an explicit Pallas kernel: one whole-array HBM->HBM DMA."""
    if x.size == 0:
        return x

    orig_shape = x.shape
    total = int(x.size)

    cols = _choose_cols(total)
    if cols == 0:
        # Fewer than 128 elements (or not a multiple of 128): a kernel launch
        # is pure overhead for an identity -- the no-op is the right answer.
        return x

    rows = total // cols
    # Row-major contiguous reshape: a bitcast in XLA, no data movement.
    x2 = jnp.reshape(x, (rows, cols))

    out2 = pl.pallas_call(
        _identity_dma_kernel,
        out_shape=jax.ShapeDtypeStruct((rows, cols), x.dtype),
        # Both operands stay in HBM; the kernel body drives the DMA itself.
        in_specs=[pl.BlockSpec(memory_space=pl.ANY)],
        out_specs=pl.BlockSpec(memory_space=pl.ANY),
        scratch_shapes=[pltpu.SemaphoreType.DMA(())],
        # NOTE: no input_output_aliases -- for a non-donated input XLA would
        # insert a defensive full copy of x before the kernel (2x wall time).
    )(x2)

    return jnp.reshape(out2, orig_shape)


if __name__ == "__main__":
    key = jax.random.PRNGKey(0)
    x = jax.random.normal(key, (2, 4, 16, 16), dtype=jnp.float32)

    # Fast path (what a real model should use): literally the same array.
    y_fast = identity(x)
    assert y_fast is x

    # Pallas kernel path: single whole-slab HBM->HBM DMA.
    y = identity_pallas(x)
    jax.block_until_ready(y)
    assert y.shape == x.shape and y.dtype == x.dtype
    assert bool(jnp.all(y == x))

    # Different dtype / shape still goes through the DMA path.
    xb = jax.random.normal(jax.random.PRNGKey(1), (8, 32, 128),
                           dtype=jnp.float32).astype(jnp.bfloat16)
    yb = identity_pallas(xb)
    jax.block_until_ready(yb)
    assert yb.shape == xb.shape and yb.dtype == xb.dtype
    assert bool(jnp.all(yb == xb))

    # Tiny / odd-sized input takes the documented no-op fast path.
    xs = jnp.arange(7, dtype=jnp.int32)
    ys = identity_pallas(xs)
    assert bool(jnp.all(ys == xs))

    print("KERNEL_OK")
</pallas_src>

<mosaic_0001>
module attributes {stable_mosaic.version = 11 : i64} {
  func.func @_identity_dma_kernel(%arg0: memref<1x2048xf32, #tpu.memory_space<any>>, %arg1: memref<1x2048xf32, #tpu.memory_space<any>>, %arg2: memref<!tpu.dma_semaphore, #tpu.memory_space<semaphore_mem>>) attributes {dimension_semantics = [], scalar_prefetch = 0 : i64, scratch_operands = 1 : i64, tpu.core_type = #tpu.core_type<tc>} {
    tpu.enqueue_dma source(%arg0 : memref<1x2048xf32, #tpu.memory_space<any>>) target(%arg1 : memref<1x2048xf32, #tpu.memory_space<any>>) target_semaphore(%arg2 : memref<!tpu.dma_semaphore, #tpu.memory_space<semaphore_mem>>)
    tpu.wait_dma2 semaphore(%arg2 : memref<!tpu.dma_semaphore, #tpu.memory_space<semaphore_mem>>) src(%arg0 : memref<1x2048xf32, #tpu.memory_space<any>>) dst(%arg1 : memref<1x2048xf32, #tpu.memory_space<any>>)
    return
  }
}

</mosaic_0001>

<llo_original>
// kernel: tpu_custom_call.1
$region0: #{tpu_custom_call.1}
  #allocation0 [shape = 'u32[]', space=smem, size = 0x4, offset = 0x4, fixed_abs, tag = 'smem constant byte address 0x4 - core index']
  #allocation1 [shape = 'u32[144,128]{1,0:T(1,128)}', space=vmem, size = 0x12000, scoped, tag = 'internal scratch']
  #allocation2 [shape = 's32[1]{0}', space=sflag, size = 0x4, scoped, tag = 'scratch operand']
  #allocation3 [shape = 's32[]', space=sflag, size = 0x4, offset = 0, fixed_abs, tag = 'sflag constant byte address 0x0 - dummy sync flag']
  #allocation4 [shape = 'u32[0]{0}', space=smem, size = 0, offset = 0, fixed_abs, tag = 'smem constant byte address 0x0 - null']
  %s0 = inlined_call_operand.hbm [shape: f32[1,2048], index: 0, kind: input, shape index: {}]
  %s1 = inlined_call_operand.hbm [shape: f32[1,2048], index: 1, kind: output, shape index: {}]
  %s2 = sld [smem:[#allocation0]]
  $region2: #{tpu_custom_call.1} parent=0
    _
  %s4 = ssub.s32 1, %s2
  %s5 = scalar_select 0, %s4, %s2
  %s7 = sshll.u32 1, 14
  %s8 = sxor.u32 4294967295, %s7
  %12 = dma.general %s0, 256, %s1, [#allocation2], 131072, [#allocation4], 0, 0
  %s13 = smul.u32 1, 16
  %s14 = sshll.u32 %s13, 4
  %15 = dma.done [#allocation2], %s14
  %16 = vsyncmov [#allocation2]
  %s17 = vpop.sfrf %16
  %p18 = scmp.eq.s32.totalorder %s17, 0
  %p19 = pneg %p18
  %21 = shalt.err (%p19)

</llo_original>
